<compile_context>
chip_gen: v5e
topology: v5e:2x2
jax: 0.10.0
libtpu: 0.0.40
codegen_flags: <defaults>
</compile_context>

<pallas_src>
import math

import jax
import jax.numpy as jnp
from jax.experimental import pallas as pl
from jax.experimental.pallas import tpu as pltpu


_LANE = 128
_SUBLANE = 8
_MAX_BATCH_TILE = 128   # <=128 rows per tile -> >=2 parallel steps when B>128 (v7x megacore)
_MAX_EVENT_TILE = 512   # <=512 event columns per chunk (matches 256x256 MXU nicely)


def _round_up(x, m):
    return (x + m - 1) // m * m


def _ceil_div(a, b):
    return -(-a // b)


def _choose_tiles(B, nm1):
    """Balanced batch / event tiling with minimal padding."""
    # batch axis
    if B <= _MAX_BATCH_TILE:
        nb = 1
        TB = _round_up(B, _SUBLANE)
    else:
        nb = _ceil_div(B, _MAX_BATCH_TILE)
        TB = _round_up(_ceil_div(B, nb), _SUBLANE)
    BP = nb * TB
    # event axis (lane-aligned chunks)
    nk = _ceil_div(nm1, _MAX_EVENT_TILE)
    TK = _round_up(_ceil_div(nm1, nk), _LANE)
    NP = nk * TK
    return TB, nb, BP, TK, nk, NP


def _coalescent_kernel(scalars_ref, iv_ref, ei_ref, tri_ref, out_ref,
                       carry_ref, wsum_ref, cnt_ref):
    # scalars_ref: SMEM (2,)       f32  [log_pop_size, exp(-log_pop_size)]
    # iv_ref:      VMEM (TB, TK)   f32  zero-padded interval lengths
    # ei_ref:      VMEM (TB, TK)   bf16 zero-padded sorted event_info (+-1)
    # tri_ref:     VMEM (TK, TK)   bf16 upper-triangular ones (tri[r,c]=1 if r<=c)
    # out_ref:     VMEM (TB, 128)  f32  ll broadcast across lanes
    # carry_ref:   VMEM (TB, 1)    f32  running cumsum carry across event chunks
    # wsum_ref:    VMEM (TB, 1)    f32  running sum(intervals * cf)
    # cnt_ref:     VMEM (TB, 1)    f32  running coalescent_count
    k = pl.program_id(1)

    @pl.when(k == 0)
    def _():
        carry_ref[...] = jnp.zeros_like(carry_ref)
        wsum_ref[...] = jnp.zeros_like(wsum_ref)
        cnt_ref[...] = jnp.zeros_like(cnt_ref)

    ei = ei_ref[...]                                   # (TB, TK) bf16
    iv = iv_ref[...]                                   # (TB, TK) f32

    # Chunk-local prefix sum on the MXU (bf16 operands are exact for +-1/0,
    # accumulation in f32), then add the carry from previous chunks.
    csum = jnp.dot(ei, tri_ref[...],
                   preferred_element_type=jnp.float32) + carry_ref[...]

    # cf = lineages*(lineages-1)/2 with lineages = 1 + csum, fused into the reduce.
    # Padded columns have iv == 0 and ei == 0, so they contribute nothing.
    wsum_ref[...] += jnp.sum(iv * (0.5 * (csum * csum + csum)),
                             axis=-1, keepdims=True)
    cnt_ref[...] += jnp.sum((ei == 1.0).astype(jnp.float32),
                            axis=-1, keepdims=True)
    carry_ref[...] = csum[:, -1:]

    @pl.when(k == pl.num_programs(1) - 1)
    def _():
        log_pop_size = scalars_ref[0]
        inv_eff_pop = scalars_ref[1]
        ll = -log_pop_size * cnt_ref[...] - wsum_ref[...] * inv_eff_pop   # (TB, 1)
        out_ref[...] = jnp.broadcast_to(ll, out_ref.shape)                # lane-dense


def fixed_pop_coalescent_forward(height, event_info,
                                 log_pop_size=math.log(5.0),
                                 monitor_prior=True):
    """Equivalent of FixedPopCoalescent.update_batch(...) followed by forward(...)."""
    height = height.astype(jnp.float32)
    event_info = event_info.astype(jnp.float32)
    B, N = height.shape
    assert N >= 2, "need at least two events per tree"

    # ---- glue (plain JAX): descending sort + gather + interval differencing ----
    order = jnp.argsort(-height, axis=-1)
    event_time = jnp.take_along_axis(height, order, axis=-1)              # (B, N)
    ei = jnp.take_along_axis(event_info, order, axis=-1)[:, :-1]          # (B, N-1)
    intervals = event_time[:, :-1] - event_time[:, 1:]                    # (B, N-1)

    nm1 = N - 1
    TB, nb, BP, TK, nk, NP = _choose_tiles(B, nm1)

    # event_info entries are exactly in {+1, -1} (zero padding added here), all of
    # which are exact in bf16, so the bf16 MXU cumsum is bit-identical to f32.
    ei_p = jnp.zeros((BP, NP), jnp.bfloat16).at[:B, :nm1].set(ei.astype(jnp.bfloat16))
    iv_p = jnp.zeros((BP, NP), jnp.float32).at[:B, :nm1].set(intervals)

    # (TK, TK) upper-triangular ones, built once in the wrapper; constant index_map
    # below means Pallas keeps it resident rather than re-fetching per grid step.
    row = jax.lax.broadcasted_iota(jnp.int32, (TK, TK), 0)
    col = jax.lax.broadcasted_iota(jnp.int32, (TK, TK), 1)
    tri = (row <= col).astype(jnp.bfloat16)

    lps = jnp.asarray(log_pop_size, dtype=jnp.float32)
    scalars = jnp.stack([lps, jnp.exp(-lps)])          # (2,) SMEM prefetch

    flops = 2 * BP * NP * TK + 8 * BP * NP
    bytes_accessed = 6 * BP * NP + 2 * TK * TK + 4 * BP * _LANE

    ll_full = pl.pallas_call(
        _coalescent_kernel,
        out_shape=jax.ShapeDtypeStruct((BP, _LANE), jnp.float32),
        grid_spec=pltpu.PrefetchScalarGridSpec(
            num_scalar_prefetch=1,
            grid=(nb, nk),
            in_specs=[
                pl.BlockSpec((TB, TK), lambda i, k, s: (i, k)),   # intervals (f32)
                pl.BlockSpec((TB, TK), lambda i, k, s: (i, k)),   # event_info (bf16)
                pl.BlockSpec((TK, TK), lambda i, k, s: (0, 0)),   # tri (constant block)
            ],
            out_specs=pl.BlockSpec((TB, _LANE), lambda i, k, s: (i, 0)),
            scratch_shapes=[
                pltpu.VMEM((TB, 1), jnp.float32),   # cumsum carry
                pltpu.VMEM((TB, 1), jnp.float32),   # sum(intervals * cf)
                pltpu.VMEM((TB, 1), jnp.float32),   # coalescent_count
            ],
        ),
        compiler_params=pltpu.CompilerParams(
            dimension_semantics=("parallel", "arbitrary")),
        cost_estimate=pl.CostEstimate(flops=flops, transcendentals=0,
                                      bytes_accessed=bytes_accessed),
    )(scalars, iv_p, ei_p, tri)

    ll = ll_full[:B, 0]
    if monitor_prior:
        return ll, ll - lps
    return ll, None


def _reference_forward(height, event_info, log_pop_size, monitor_prior=True):
    """Pure-JAX reference mirroring the PyTorch module line by line."""
    height = height.astype(jnp.float32)
    event_info = event_info.astype(jnp.float32)
    order = jnp.argsort(-height, axis=-1)
    event_time = jnp.take_along_axis(height, order, axis=-1)
    ei = jnp.take_along_axis(event_info, order, axis=-1)[:, :-1]
    lineages = 1.0 + jnp.cumsum(ei, axis=-1)
    intervals = event_time[:, :-1] - event_time[:, 1:]
    cf = lineages * (lineages - 1.0) / 2.0
    coalescent_count = jnp.sum((ei == 1.0).astype(jnp.float32), axis=-1)
    eff_pop_size = math.exp(log_pop_size)
    ll = -log_pop_size * coalescent_count - jnp.sum(intervals * cf, axis=-1) / eff_pop_size
    if monitor_prior:
        return ll, ll - log_pop_size
    return ll, None


def _run_case(key, B, N, log_pop_size):
    k_h, k_e = jax.random.split(key)
    height = jax.random.uniform(k_h, (B, N), dtype=jnp.float32, minval=0.0, maxval=10.0)
    # event_info: +1 for coalescent events, -1 for sampling events (as in vbpi)
    event_info = jnp.where(
        jax.random.bernoulli(k_e, 0.5, (B, N)), 1.0, -1.0
    ).astype(jnp.float32)

    ll, prior = fixed_pop_coalescent_forward(height, event_info, log_pop_size,
                                             monitor_prior=True)
    jax.block_until_ready((ll, prior))

    ll_ref, prior_ref = _reference_forward(height, event_info, log_pop_size)
    assert jnp.allclose(ll, ll_ref, rtol=1e-5, atol=1e-3), (ll, ll_ref)
    assert jnp.allclose(prior, prior_ref, rtol=1e-5, atol=1e-3), (prior, prior_ref)


if __name__ == "__main__":
    log_pop_size = math.log(5.0)  # FixedPopCoalescent default parameter
    key = jax.random.PRNGKey(0)
    k1, k2 = jax.random.split(key)

    # Small case (nb=1, nk=1): B trees, N node-height events per tree.
    _run_case(k1, B=8, N=64, log_pop_size=log_pop_size)
    # Larger case exercising the multi-tile batch axis and the K-chunked cumsum
    # (nb=2, nk=2).
    _run_case(k2, B=140, N=600, log_pop_size=log_pop_size)

    print("KERNEL_OK")
</pallas_src>

<mosaic_0001>
module attributes {stable_mosaic.version = 11 : i64} {
  func.func @_coalescent_kernel(%arg0: i32, %arg1: i32, %arg2: memref<2xf32, #tpu.memory_space<smem>>, %arg3: memref<8x128xf32, #tpu.memory_space<vmem>>, %arg4: memref<8x128xbf16, #tpu.memory_space<vmem>>, %arg5: memref<128x128xbf16, #tpu.memory_space<vmem>>, %arg6: memref<8x128xf32, #tpu.memory_space<vmem>>, %arg7: memref<8x1xf32, #tpu.memory_space<vmem>>, %arg8: memref<8x1xf32, #tpu.memory_space<vmem>>, %arg9: memref<8x1xf32, #tpu.memory_space<vmem>>) attributes {dimension_semantics = [#tpu.dimension_semantics<parallel>, #tpu.dimension_semantics<arbitrary>], iteration_bounds = array<i64: 1, 1>, scalar_prefetch = 1 : i64, scratch_operands = 3 : i64, tpu.core_type = #tpu.core_type<tc>, window_params = [{transform_indices = @transform_0, window_bounds = array<i64: 8, 128>}, {transform_indices = @transform_1, window_bounds = array<i64: 8, 128>}, {pipeline_mode = #tpu.pipeline_mode<synchronous>, transform_indices = @transform_2, window_bounds = array<i64: 128, 128>}, {transform_indices = @transform_3, window_bounds = array<i64: 8, 128>}]} {
    %c0_i32 = arith.constant 0 : i32
    %0 = arith.cmpi eq, %arg1, %c0_i32 : i32
    %1 = arith.extui %0 : i1 to i32
    %c0_i32_0 = arith.constant 0 : i32
    %2 = arith.cmpi ne, %1, %c0_i32_0 : i32
    scf.if %2 {
      %cst_24 = arith.constant 0.000000e+00 : f32
      %34 = vector.broadcast %cst_24 : f32 to vector<8x1xf32>
      %c0_25 = arith.constant 0 : index
      %c0_26 = arith.constant 0 : index
      %35 = vector.load %arg7[%c0_25, %c0_26] : memref<8x1xf32, #tpu.memory_space<vmem>>, vector<8x1xf32>
      tpu.vector_store %arg7[%c0_25, %c0_26], %34 {strides = array<i32>} : memref<8x1xf32, #tpu.memory_space<vmem>>, vector<8x1xf32>,
      %cst_27 = arith.constant 0.000000e+00 : f32
      %36 = vector.broadcast %cst_27 : f32 to vector<8x1xf32>
      %c0_28 = arith.constant 0 : index
      %c0_29 = arith.constant 0 : index
      %37 = vector.load %arg8[%c0_28, %c0_29] : memref<8x1xf32, #tpu.memory_space<vmem>>, vector<8x1xf32>
      tpu.vector_store %arg8[%c0_28, %c0_29], %36 {strides = array<i32>} : memref<8x1xf32, #tpu.memory_space<vmem>>, vector<8x1xf32>,
      %cst_30 = arith.constant 0.000000e+00 : f32
      %38 = vector.broadcast %cst_30 : f32 to vector<8x1xf32>
      %c0_31 = arith.constant 0 : index
      %c0_32 = arith.constant 0 : index
      %39 = vector.load %arg9[%c0_31, %c0_32] : memref<8x1xf32, #tpu.memory_space<vmem>>, vector<8x1xf32>
      tpu.vector_store %arg9[%c0_31, %c0_32], %38 {strides = array<i32>} : memref<8x1xf32, #tpu.memory_space<vmem>>, vector<8x1xf32>,
    } else {
    }
    %c0 = arith.constant 0 : index
    %c0_1 = arith.constant 0 : index
    %3 = vector.load %arg4[%c0, %c0_1] : memref<8x128xbf16, #tpu.memory_space<vmem>>, vector<8x128xbf16>
    %c0_2 = arith.constant 0 : index
    %c0_3 = arith.constant 0 : index
    %4 = vector.load %arg3[%c0_2, %c0_3] : memref<8x128xf32, #tpu.memory_space<vmem>>, vector<8x128xf32>
    %c0_4 = arith.constant 0 : index
    %c0_5 = arith.constant 0 : index
    %5 = vector.load %arg5[%c0_4, %c0_5] : memref<128x128xbf16, #tpu.memory_space<vmem>>, vector<128x128xbf16>
    %cst = arith.constant dense<0.000000e+00> : vector<8x128xf32>
    %6 = tpu.matmul %3, %5, %cst {dimension_numbers = #tpu.dot_dimension_numbers<[1], [0], [0], [1], [0, 0, 1, 1], [], []>} : vector<8x128xbf16>, vector<128x128xbf16>, vector<8x128xf32> -> vector<8x128xf32>
    %c0_6 = arith.constant 0 : index
    %c0_7 = arith.constant 0 : index
    %7 = vector.load %arg7[%c0_6, %c0_7] : memref<8x1xf32, #tpu.memory_space<vmem>>, vector<8x1xf32>
    %8 = vector.broadcast %7 : vector<8x1xf32> to vector<8x128xf32>
    %9 = arith.addf %6, %8 : vector<8x128xf32>
    %c0_8 = arith.constant 0 : index
    %c0_9 = arith.constant 0 : index
    %10 = vector.load %arg8[%c0_8, %c0_9] : memref<8x1xf32, #tpu.memory_space<vmem>>, vector<8x1xf32>
    %11 = arith.mulf %9, %9 : vector<8x128xf32>
    %12 = arith.addf %11, %9 : vector<8x128xf32>
    %cst_10 = arith.constant 5.000000e-01 : f32
    %13 = vector.broadcast %cst_10 : f32 to vector<8x128xf32>
    %14 = arith.mulf %13, %12 : vector<8x128xf32>
    %15 = arith.mulf %4, %14 : vector<8x128xf32>
    %cst_11 = arith.constant dense<0.000000e+00> : vector<8xf32>
    %16 = vector.multi_reduction <add>, %15, %cst_11 [1] : vector<8x128xf32> to vector<8xf32>
    %17 = vector.shape_cast %16 : vector<8xf32> to vector<8x1xf32>
    %18 = arith.addf %10, %17 : vector<8x1xf32>
    %c0_12 = arith.constant 0 : index
    %c0_13 = arith.constant 0 : index
    %19 = vector.load %arg8[%c0_12, %c0_13] : memref<8x1xf32, #tpu.memory_space<vmem>>, vector<8x1xf32>
    tpu.vector_store %arg8[%c0_12, %c0_13], %18 {strides = array<i32>} : memref<8x1xf32, #tpu.memory_space<vmem>>, vector<8x1xf32>,
    %c0_14 = arith.constant 0 : index
    %c0_15 = arith.constant 0 : index
    %20 = vector.load %arg9[%c0_14, %c0_15] : memref<8x1xf32, #tpu.memory_space<vmem>>, vector<8x1xf32>
    %cst_16 = arith.constant 1.000000e+00 : bf16
    %21 = vector.broadcast %cst_16 : bf16 to vector<8x128xbf16>
    %22 = arith.cmpf oeq, %3, %21 : vector<8x128xbf16>
    %23 = arith.extui %22 : vector<8x128xi1> to vector<8x128xi32>
    %24 = arith.sitofp %23 : vector<8x128xi32> to vector<8x128xf32>
    %cst_17 = arith.constant dense<0.000000e+00> : vector<8xf32>
    %25 = vector.multi_reduction <add>, %24, %cst_17 [1] : vector<8x128xf32> to vector<8xf32>
    %26 = vector.shape_cast %25 : vector<8xf32> to vector<8x1xf32>
    %27 = arith.addf %20, %26 : vector<8x1xf32>
    %c0_18 = arith.constant 0 : index
    %c0_19 = arith.constant 0 : index
    %28 = vector.load %arg9[%c0_18, %c0_19] : memref<8x1xf32, #tpu.memory_space<vmem>>, vector<8x1xf32>
    tpu.vector_store %arg9[%c0_18, %c0_19], %27 {strides = array<i32>} : memref<8x1xf32, #tpu.memory_space<vmem>>, vector<8x1xf32>,
    %29 = vector.extract_strided_slice %9 {offsets = [0, 127], sizes = [8, 1], strides = [1, 1]} : vector<8x128xf32> to vector<8x1xf32>
    %c0_20 = arith.constant 0 : index
    %c0_21 = arith.constant 0 : index
    %30 = vector.load %arg7[%c0_20, %c0_21] : memref<8x1xf32, #tpu.memory_space<vmem>>, vector<8x1xf32>
    tpu.vector_store %arg7[%c0_20, %c0_21], %29 {strides = array<i32>} : memref<8x1xf32, #tpu.memory_space<vmem>>, vector<8x1xf32>,
    %c0_i32_22 = arith.constant 0 : i32
    %31 = arith.cmpi eq, %arg1, %c0_i32_22 : i32
    %32 = arith.extui %31 : i1 to i32
    %c0_i32_23 = arith.constant 0 : i32
    %33 = arith.cmpi ne, %32, %c0_i32_23 : i32
    scf.if %33 {
      %c0_24 = arith.constant 0 : index
      %34 = memref.load %arg2[%c0_24] : memref<2xf32, #tpu.memory_space<smem>>
      %c1 = arith.constant 1 : index
      %35 = memref.load %arg2[%c1] : memref<2xf32, #tpu.memory_space<smem>>
      %cst_25 = arith.constant 0.000000e+00 : f32
      %36 = arith.subf %cst_25, %34 : f32
      %c0_26 = arith.constant 0 : index
      %c0_27 = arith.constant 0 : index
      %37 = vector.load %arg9[%c0_26, %c0_27] : memref<8x1xf32, #tpu.memory_space<vmem>>, vector<8x1xf32>
      %38 = vector.broadcast %36 : f32 to vector<8x1xf32>
      %39 = arith.mulf %38, %37 : vector<8x1xf32>
      %c0_28 = arith.constant 0 : index
      %c0_29 = arith.constant 0 : index
      %40 = vector.load %arg8[%c0_28, %c0_29] : memref<8x1xf32, #tpu.memory_space<vmem>>, vector<8x1xf32>
      %41 = vector.broadcast %35 : f32 to vector<8x1xf32>
      %42 = arith.mulf %40, %41 : vector<8x1xf32>
      %43 = arith.subf %39, %42 : vector<8x1xf32>
      %44 = vector.shape_cast %43 : vector<8x1xf32> to vector<8x1xf32>
      %45 = vector.broadcast %44 : vector<8x1xf32> to vector<8x128xf32>
      %c0_30 = arith.constant 0 : index
      %c0_31 = arith.constant 0 : index
      %46 = vector.load %arg6[%c0_30, %c0_31] : memref<8x128xf32, #tpu.memory_space<vmem>>, vector<8x128xf32>
      tpu.vector_store %arg6[%c0_30, %c0_31], %45 {strides = array<i32>} : memref<8x128xf32, #tpu.memory_space<vmem>>, vector<8x128xf32>,
    } else {
    }
    return
  }
  func.func @transform_0(%arg0: i32, %arg1: i32, %arg2: memref<2xf32, #tpu.memory_space<smem>>) -> (i32, i32) {
    %c0_i32 = arith.constant 0 : i32
    return %arg0, %arg1 : i32, i32
  }
  func.func @transform_1(%arg0: i32, %arg1: i32, %arg2: memref<2xf32, #tpu.memory_space<smem>>) -> (i32, i32) {
    %c0_i32 = arith.constant 0 : i32
    return %arg0, %arg1 : i32, i32
  }
  func.func @transform_2(%arg0: i32, %arg1: i32, %arg2: memref<2xf32, #tpu.memory_space<smem>>) -> (i32, i32) {
    %c0_i32 = arith.constant 0 : i32
    %c0_i32_0 = arith.constant 0 : i32
    %c0_i32_1 = arith.constant 0 : i32
    return %c0_i32, %c0_i32_0 : i32, i32
  }
  func.func @transform_3(%arg0: i32, %arg1: i32, %arg2: memref<2xf32, #tpu.memory_space<smem>>) -> (i32, i32) {
    %c0_i32 = arith.constant 0 : i32
    %c0_i32_0 = arith.constant 0 : i32
    return %arg0, %c0_i32 : i32, i32
  }
}

</mosaic_0001>

<llo_original>
// kernel: tpu_custom_call.1
$region0: #{tpu_custom_call.1}
  #allocation0 [shape = 'u32[]', space=smem, size = 0x4, offset = 0x4, fixed_abs, tag = 'smem constant byte address 0x4 - core index']
  #allocation1 [shape = 'u32[72,128]{1,0:T(1,128)}', space=vmem, size = 0x9000, scoped, tag = 'internal scratch']
  #allocation2 [shape = 'f32[8,1]{1,0:T(8,128)}', space=vmem, size = 0x1000, scoped, tag = 'scratch operand']
  #allocation3 [shape = 'f32[8,1]{1,0:T(8,128)}', space=vmem, size = 0x1000, scoped, tag = 'scratch operand']
  #allocation4 [shape = 'f32[8,1]{1,0:T(8,128)}', space=vmem, size = 0x1000, scoped, tag = 'scratch operand']
  #allocation5 [shape = 's32[1]{0}', space=sflag, size = 0x4, scoped, tag = 'scoped memory for tpu_custom_call.1']
  #allocation6 [shape = 'u8[512]{0}', space=smem, size = 0x200, scoped, tag = 'prefetched SMEM operand 0']
  %s0 = inlined_call_operand.hbm [shape: f32[2], index: 0, kind: input, shape index: {}]
  %s1 = inlined_call_operand.hbm [shape: f32[8,128], index: 1, kind: input, shape index: {}]
  %s2 = inlined_call_operand.hbm [shape: bf16[8,128], index: 2, kind: input, shape index: {}]
  %s3 = inlined_call_operand.hbm [shape: bf16[128,128], index: 3, kind: input, shape index: {}]
  %s4 = inlined_call_operand.hbm [shape: f32[8,128], index: 4, kind: output, shape index: {}]
  %s5 = sld [smem:[#allocation0]]
  $region42: #{tpu_custom_call.1} parent=0
    _
  %s7 = ssub.s32 1, %s5
  %s8 = scalar_select 0, %s7, %s5
  %s10 = sshll.u32 %s0, 4
  %s11 = int_to_ptr.hbm [resolvable:$true] %s10
  %13 = dma.hbm_to_smem %s11, 16, [#allocation6], [#allocation5]
  %15 = dma.done [#allocation5], 16
  %16 = sfence
  $region1: #{tpu_custom_call.1} parent=0
    #allocation7 [shape = 'u8[4096]{0}', space=vmem, size = 0x1000, scoped, tag = 'input window, operand 1, single buffered']
    #allocation8 [shape = 's32[1]{0}', space=sflag, size = 0x4, scoped, tag = 'scoped memory for tpu_custom_call.1']
    #allocation9 [shape = 's32[1]{0}', space=sflag, size = 0x4, scoped, tag = 'scoped memory for tpu_custom_call.1']
    #allocation10 [shape = 'u8[2048]{0}', space=vmem, size = 0x800, scoped, tag = 'input window, operand 2, single buffered']
    #allocation11 [shape = 's32[1]{0}', space=sflag, size = 0x4, scoped, tag = 'scoped memory for tpu_custom_call.1']
    #allocation12 [shape = 'u8[32768]{0}', space=vmem, size = 0x8000, scoped, tag = 'input window, operand 3, single buffered']
    #allocation13 [shape = 'u8[4096]{0}', space=vmem, size = 0x1000, scoped, tag = 'output window, operand 0, single buffered']
    %17 = vsyncpa [#allocation8], 0
    %18 = vsyncpa [#allocation11], 0
    %19 = vsyncpa [#allocation9], 0
    // Predicated region
    $region2: #{tpu_custom_call.1} parent=1 // pred_check
      _
    $region3: #{tpu_custom_call.1} parent=1 // pred_check_branch
      %21 = sbr.rel (0) target = $region5
    $region4: #{tpu_custom_call.1} parent=1 // pred_region
      %23 = vsyncadd [#allocation8], 0
      %s25 = sshll.u32 %s1, 4
      %s26 = int_to_ptr.hbm [resolvable:$true] %s25
      %s27 = sshll.u32 [#allocation7], 4
      %s28 = int_to_ptr.vmem [resolvable:$true] %s27
      %30 = dma.hbm_to_vmem [thread:$0]  %s26, 128, %s28, [#allocation8]
    $region5: #{tpu_custom_call.1} parent=1 // pred_fallthru
      _
    // Predicated region
    $region6: #{tpu_custom_call.1} parent=1 // pred_check
      _
    $region7: #{tpu_custom_call.1} parent=1 // pred_check_branch
      %32 = sbr.rel (0) target = $region9
    $region8: #{tpu_custom_call.1} parent=1 // pred_region
      %34 = vsyncadd [#allocation11], 0
      %s36 = sshll.u32 %s2, 4
      %s37 = int_to_ptr.hbm [resolvable:$true] %s36
      %s38 = sshll.u32 [#allocation10], 4
      %s39 = int_to_ptr.vmem [resolvable:$true] %s38
      %41 = dma.hbm_to_vmem [thread:$0]  %s37, 64, %s39, [#allocation11]
    $region9: #{tpu_custom_call.1} parent=1 // pred_fallthru
      _
    // Predicated region
    $region10: #{tpu_custom_call.1} parent=1 // pred_check
      _
    $region11: #{tpu_custom_call.1} parent=1 // pred_check_branch
      %43 = sbr.rel (0) target = $region13
    $region12: #{tpu_custom_call.1} parent=1 // pred_region
      %45 = vsyncadd [#allocation11], 0
      %s46 = sshll.u32 %s3, 4
      %s47 = int_to_ptr.hbm [resolvable:$true] %s46
      %s48 = sshll.u32 [#allocation12], 4
      %s49 = int_to_ptr.vmem [resolvable:$true] %s48
      %54 = dma.hbm_to_vmem [thread:$0]  %s47, 1024, %s49, [#allocation11], 64, 64, 4
    $region13: #{tpu_custom_call.1} parent=1 // pred_fallthru
      _
    // Predicated region
    $region14: #{tpu_custom_call.1} parent=1 // pred_check
      _
    $region15: #{tpu_custom_call.1} parent=1 // pred_check_branch
      %56 = sbr.rel (0) target = $region17
    $region16: #{tpu_custom_call.1} parent=1 // pred_region
      %58 = dma.done [#allocation8], 128
    $region17: #{tpu_custom_call.1} parent=1 // pred_fallthru
      _
    // Predicated region
    $region18: #{tpu_custom_call.1} parent=1 // pred_check
      _
    $region19: #{tpu_custom_call.1} parent=1 // pred_check_branch
      %60 = sbr.rel (0) target = $region21
    $region20: #{tpu_custom_call.1} parent=1 // pred_region
      %62 = dma.done [#allocation11], 64
    $region21: #{tpu_custom_call.1} parent=1 // pred_fallthru
      _
    // Predicated region
    $region22: #{tpu_custom_call.1} parent=1 // pred_check
      _
    $region23: #{tpu_custom_call.1} parent=1 // pred_check_branch
      %64 = sbr.rel (0) target = $region25
    $region24: #{tpu_custom_call.1} parent=1 // pred_region
      %66 = dma.done [#allocation11], 1024
    $region25: #{tpu_custom_call.1} parent=1 // pred_fallthru
      _
    %p67 = scmp.eq.s32.totalorder 0, 0
    // Predicated region
    $region26: #{tpu_custom_call.1} parent=1 // pred_check
      %p68 = pneg %p67
    $region27: #{tpu_custom_call.1} parent=1 // pred_check_branch
      %70 = sbr.rel (%p68) target = $region29
    $region28: #{tpu_custom_call.1} parent=1 // pred_region
      %vm71 = vcmask 7168
      %72 = vst.msk [vmem:[#allocation2] sm:$0xff] %vm71, 0.0
      %73 = vst.msk [vmem:[#allocation3] sm:$0xff] %vm71, 0.0
      %74 = vst.msk [vmem:[#allocation4] sm:$0xff] %vm71, 0.0
    $region29: #{tpu_custom_call.1} parent=1 // pred_fallthru
      _
    %v75 = vld [vmem:[#allocation10] sm:$0xf]
    %v76 = vld [vmem:[#allocation7] sm:$0xff]
    %v77 = vld [vmem:[#allocation12] sm:$0xf]
    %v78 = vld [vmem:[#allocation12 + $0x4] sm:$0xf]
    %v79 = vld [vmem:[#allocation12 + $0x8] sm:$0xf]
    %v80 = vld [vmem:[#allocation12 + $0xc] sm:$0xf]
    %v81 = vld [vmem:[#allocation12 + $0x10] sm:$0xf]
    %v82 = vld [vmem:[#allocation12 + $0x14] sm:$0xf]
    %v83 = vld [vmem:[#allocation12 + $0x18] sm:$0xf]
    %v84 = vld [vmem:[#allocation12 + $0x1c] sm:$0xf]
    %v85 = vld [vmem:[#allocation12 + $0x20] sm:$0xf]
    %v86 = vld [vmem:[#allocation12 + $0x24] sm:$0xf]
    %v87 = vld [vmem:[#allocation12 + $0x28] sm:$0xf]
    %v88 = vld [vmem:[#allocation12 + $0x2c] sm:$0xf]
    %v89 = vld [vmem:[#allocation12 + $0x30] sm:$0xf]
    %v90 = vld [vmem:[#allocation12 + $0x34] sm:$0xf]
    %v91 = vld [vmem:[#allocation12 + $0x38] sm:$0xf]
    %v92 = vld [vmem:[#allocation12 + $0x3c] sm:$0xf]
    %v93 = vld [vmem:[#allocation2] sm:$0xff]
    %95 = vset.pattern.permute.xlu0 0
    %96 = vperm.xlu0 %95, %v93
    %v97 = vpop.permute.xlu0 %96
    %v115 = vunpack.c.l.b16 %v77
    %v116 = vunpack.c.l.b16 %v78
    %v117 = vunpack.c.l.b16 %v79
    %v118 = vunpack.c.l.b16 %v80
    %v119 = vunpack.c.l.b16 %v81
    %v120 = vunpack.c.l.b16 %v82
    %v121 = vunpack.c.l.b16 %v83
    %v122 = vunpack.c.l.b16 %v84
    %v123 = vunpack.c.l.b16 %v85
    %v124 = vunpack.c.l.b16 %v86
    %v125 = vunpack.c.l.b16 %v87
    %v126 = vunpack.c.l.b16 %v88
    %v127 = vunpack.c.l.b16 %v89
    %v128 = vunpack.c.l.b16 %v90
    %v129 = vunpack.c.l.b16 %v91
    %v130 = vunpack.c.l.b16 %v92
    %v131 = vpack.c.b16 %v116, %v115
    %v132 = vpack.c.b16 %v118, %v117
    %v133 = vpack.c.b16 %v120, %v119
    %v134 = vpack.c.b16 %v122, %v121
    %v135 = vpack.c.b16 %v124, %v123
    %v136 = vpack.c.b16 %v126, %v125
    %v137 = vpack.c.b16 %v128, %v127
    %v138 = vpack.c.b16 %v130, %v129
    %147 = vmatpush.bf16.msra.mxu0 %v138
    %148 = vmatpush.bf16.msra.mxu0 %v137
    %149 = vmatpush.bf16.msra.mxu0 %v136
    %150 = vmatpush.bf16.msra.mxu0 %v135
    %151 = vmatpush.bf16.msra.mxu0 %v134
    %152 = vmatpush.bf16.msra.mxu0 %v133
    %153 = vmatpush.bf16.msra.mxu0 %v132
    %154 = vmatpush.bf16.msra.mxu0 %v131
    %155 = vmatmul.bf16.gmra.mxu0 %v75
    %v156 = vpop.f32.mrf.mxu0
    %v157 = vadd.f32 %v97, %v156
    %v158 = vpop.f32.mrf.mxu0
    %159 = vdwg.mxu0
    %v160 = vld [vmem:[#allocation3] sm:$0xff]
    %v161 = vmul.f32 %v157, %v157
    %v162 = vadd.f32 %v161, %v157
    %v163 = vmul.f32 %v162, 0.5
    %v164 = vmul.f32 %v76, %v163
    %165 = vadd.xlane.f32.xlu0 %v164
    %v166 = vpop.xlane.xlu0 %165
    %v167 = vadd.f32 %v160, %v166
    %vm168 = vcmask 7168
    %169 = vst.msk [vmem:[#allocation3] sm:$0xff] %vm168, %v167
    %v170 = vld [vmem:[#allocation4] sm:$0xff]
    %v171 = vunpack.c.l.bf16 %v75
    %vm172 = vcmp.eq.f32.partialorder %v171, 1.0
    %v173 = vsel %vm172, 1, 0
    %v174 = vcvt.s32.f32 %v173
    %175 = vadd.xlane.f32.xlu0 %v174
    %v176 = vpop.xlane.xlu0 %175
    %v177 = vadd.f32 %v170, %v176
    %178 = vst.msk [vmem:[#allocation4] sm:$0xff] %vm168, %v177
    %180 = vrot.lane.b32.xlu0 %v157, 1
    %v181 = vpop.permute.xlu0 %180
    %183 = vst.msk [vmem:[#allocation2] sm:$0xff] %vm168, %v181
    // Predicated region
    $region30: #{tpu_custom_call.1} parent=1 // pred_check
      %p184 = pneg %p67
    $region31: #{tpu_custom_call.1} parent=1 // pred_check_branch
      %186 = sbr.rel (%p184) target = $region33
    $region32: #{tpu_custom_call.1} parent=1 // pred_region
      %s187 = sld [smem:[#allocation6]]
      %s188 = sld [smem:[#allocation6 + $0x1]]
      %s189 = ssub.f32 0.0, %s187
      %v190 = vld [vmem:[#allocation4] sm:$0xff]
      %v191 = vstv %s189
      %v192 = vmul.f32 %v191, %v190
      %v193 = vld [vmem:[#allocation3] sm:$0xff]
      %v194 = vstv %s188
      %v195 = vmul.f32 %v193, %v194
      %v196 = vsub.f32 %v192, %v195
      %198 = vset.pattern.permute.xlu0 0
      %199 = vperm.xlu0 %198, %v196
      %v200 = vpop.permute.xlu0 %199
      %202 = vst [vmem:[#allocation13] sm:$0xff] %v200
    $region33: #{tpu_custom_call.1} parent=1 // pred_fallthru
      _
    // Predicated region
    $region34: #{tpu_custom_call.1} parent=1 // pred_check
      _
    $region35: #{tpu_custom_call.1} parent=1 // pred_check_branch
      %204 = sbr.rel (0) target = $region37
    $region36: #{tpu_custom_call.1} parent=1 // pred_region
      %206 = vsyncadd [#allocation9], 0
      %s208 = sshll.u32 [#allocation13], 4
      %s209 = int_to_ptr.vmem [resolvable:$true] %s208
      %s210 = sshll.u32 %s4, 4
      %s211 = int_to_ptr.hbm [resolvable:$true] %s210
      %213 = dma.vmem_to_hbm [thread:$0]  %s209, 128, %s211, [#allocation9]
    $region37: #{tpu_custom_call.1} parent=1 // pred_fallthru
      _
    // Predicated region
    $region38: #{tpu_custom_call.1} parent=1 // pred_check
      _
    $region39: #{tpu_custom_call.1} parent=1 // pred_check_branch
      %215 = sbr.rel (0) target = $region41
    $region40: #{tpu_custom_call.1} parent=1 // pred_region
      %217 = dma.done [#allocation9], 128
    $region41: #{tpu_custom_call.1} parent=1 // pred_fallthru
      _
    %218 = vsyncpa [#allocation8], 1
    %219 = vsyncpa [#allocation11], 1
    %220 = vsyncpa [#allocation9], 1

</llo_original>
